<compile_context>
chip_gen: v7x
topology: tpu7x:2x2x1
jax: 0.10.0
libtpu: 0.0.40
codegen_flags: <defaults>
</compile_context>

<pallas_src>
import functools

import jax
import jax.numpy as jnp
from jax import lax
from jax.experimental import pallas as pl
from jax.experimental.pallas import tpu as pltpu


# Scoped-VMEM request: above v5e's 16 MiB default, within v7x's 64 MiB physical.
_VMEM_LIMIT_BYTES = 32 * 1024 * 1024


# ---------------------------------------------------------------------------
# Single-pass fused kernel (whole (C, S) slab per batch element in VMEM).
# ---------------------------------------------------------------------------
def _fused_kernel(x_ref, w1t_ref, b1_ref, w2_ref, b2_ref, ws_ref, bs_ref,
                  o_ref, *, inv_s):
    x = x_ref[0]                                     # (C, S) native dtype
    xf = x.astype(jnp.float32)

    # cSE squeeze: AdaptiveAvgPool3d(1) -> per-channel mean, shape (C, 1).
    mean = jnp.sum(xf, axis=-1, keepdims=True) * inv_s

    # cSE excitation (1x1x1 convs == dense over channels), tiny, VPU-only:
    #   z1 = relu(w1 @ mean + b1)   -> (1, Cr)   (w1 passed transposed: (C, Cr))
    #   z2 = sigmoid(w2 @ z1 + b2)  -> (C, 1)
    z1 = jax.nn.relu(
        jnp.sum(w1t_ref[...] * mean, axis=0, keepdims=True) + b1_ref[...])
    z2 = jax.nn.sigmoid(
        jnp.sum(w2_ref[...] * z1, axis=-1, keepdims=True) + b2_ref[...])

    # sSE 1x1x1 conv: contraction over channels (sublanes) on the VPU.
    s_lin = jnp.sum(xf * ws_ref[...], axis=0, keepdims=True)     # (1, S)

    # cSE(x) + sSE(x) == x * (z2 + sigmoid(s_lin + bs)).
    gate = z2 + jax.nn.sigmoid(s_lin + bs_ref[0])                # (C, S) f32
    o_ref[0] = (x * gate.astype(x.dtype)).astype(o_ref.dtype)


# ---------------------------------------------------------------------------
# Two-pass path, pass 1: per-channel sums over tiled spatial axis (masked).
# ---------------------------------------------------------------------------
def _channel_sum_kernel(x_ref, sum_ref, acc_ref, *, tile_s, n_half, s_total):
    s = pl.program_id(2)

    @pl.when(s == 0)
    def _():
        acc_ref[...] = jnp.zeros_like(acc_ref)

    # Global spatial-tile index for this (half, step); lanes >= S are masked,
    # so no host-side padding of x is needed (a fully out-of-range duplicate
    # tile in the second half contributes exactly zero).
    t = pl.program_id(0) * n_half + s
    lane = lax.broadcasted_iota(jnp.int32, (1, tile_s), 1)
    mask = (t * tile_s + lane) < s_total
    xf = jnp.where(mask, x_ref[0].astype(jnp.float32), 0.0)      # (C, tile_s)
    acc_ref[...] += jnp.sum(xf, axis=-1, keepdims=True)          # (C, 1)

    @pl.when(s == pl.num_programs(2) - 1)
    def _():
        sum_ref[0, 0] = acc_ref[...]


# ---------------------------------------------------------------------------
# Two-pass path, pass 2: fused cSE + sSE gating over spatial tiles.
# ---------------------------------------------------------------------------
def _apply_kernel(x_ref, z2_ref, ws_ref, bs_ref, o_ref):
    x = x_ref[0]                                                 # (C, tile_s)
    xf = x.astype(jnp.float32)
    s_lin = jnp.sum(xf * ws_ref[...], axis=0, keepdims=True)     # (1, tile_s)
    gate = z2_ref[0] + jax.nn.sigmoid(s_lin + bs_ref[0])         # (C, tile_s) f32
    o_ref[0] = (x * gate.astype(x.dtype)).astype(o_ref.dtype)


def channel_spatial_se(x, w1, b1, w2, b2, ws, bs, *,
                       single_pass_max_bytes=2 * 1024 * 1024,
                       target_block_bytes=2 * 1024 * 1024):
    """x: (N, C, D, H, W). Returns cSE(x) + sSE(x), same shape/dtype as x.

    w1: (Cr, C) fc1 weight, b1: (Cr,), w2: (C, Cr) fc2 weight, b2: (C,),
    ws: (C,) sSE 1x1x1 conv weight, bs: (1,) sSE conv bias.
    """
    N, C, D, H, W = x.shape
    S = D * H * W
    orig_dtype = x.dtype
    itemsize = jnp.dtype(orig_dtype).itemsize
    f32 = jnp.float32

    x_flat = x.reshape(N, C, S)

    # Small parameters in kernel-friendly layouts (all f32).
    w1t = w1.astype(f32).T.reshape(C, -1)          # (C, Cr)
    Cr = w1t.shape[1]
    b1r = b1.astype(f32).reshape(1, Cr)
    w2m = w2.astype(f32).reshape(C, Cr)
    b2c = b2.astype(f32).reshape(C, 1)
    ws_col = ws.astype(f32).reshape(C, 1)
    bs_arr = bs.astype(f32).reshape(1)

    # ------------------------- single-pass fused path -------------------------
    slab_bytes = C * S * itemsize
    if slab_bytes <= single_pass_max_bytes:
        kernel = functools.partial(_fused_kernel, inv_s=1.0 / S)
        out_flat = pl.pallas_call(
            kernel,
            out_shape=jax.ShapeDtypeStruct((N, C, S), orig_dtype),
            grid_spec=pltpu.PrefetchScalarGridSpec(
                num_scalar_prefetch=0,
                grid=(N,),
                in_specs=[
                    pl.BlockSpec((1, C, S), lambda n: (n, 0, 0)),   # x slab
                    pl.BlockSpec((C, Cr), lambda n: (0, 0)),        # w1^T
                    pl.BlockSpec((1, Cr), lambda n: (0, 0)),        # b1
                    pl.BlockSpec((C, Cr), lambda n: (0, 0)),        # w2
                    pl.BlockSpec((C, 1), lambda n: (0, 0)),         # b2
                    pl.BlockSpec((C, 1), lambda n: (0, 0)),         # ws
                    pl.BlockSpec(memory_space=pltpu.MemorySpace.SMEM),  # bs scalar
                ],
                out_specs=pl.BlockSpec((1, C, S), lambda n: (n, 0, 0)),
            ),
            compiler_params=pltpu.CompilerParams(
                dimension_semantics=("parallel",),
                vmem_limit_bytes=_VMEM_LIMIT_BYTES),
        )(x_flat, w1t, b1r, w2m, b2c, ws_col, bs_arr)
        return out_flat.reshape(N, C, D, H, W)

    # ------------------------------ two-pass path -----------------------------
    # Byte-sized, lane-dense spatial tiles (~target_block_bytes per x block).
    lanes = max(128, (target_block_bytes // (C * itemsize)) // 128 * 128)
    s_ceil = pl.cdiv(S, 128) * 128
    tile_s = int(min(lanes, s_ceil))
    n_s_tiles = pl.cdiv(S, tile_s)

    # Split the pass-1 reduction into 2 spatial halves on a leading parallel
    # axis so both v7x TensorCores are busy even when N == 1.
    n_halves = 2 if n_s_tiles >= 2 else 1
    n_half = pl.cdiv(n_s_tiles, n_halves)

    sum_kernel = functools.partial(_channel_sum_kernel, tile_s=tile_s,
                                   n_half=n_half, s_total=S)
    partial_sums = pl.pallas_call(
        sum_kernel,
        out_shape=jax.ShapeDtypeStruct((n_halves, N, C, 1), jnp.float32),
        grid_spec=pltpu.PrefetchScalarGridSpec(
            num_scalar_prefetch=0,
            grid=(n_halves, N, n_half),
            in_specs=[pl.BlockSpec(
                (1, C, tile_s),
                lambda h, n, s: (n, 0, jnp.minimum(h * n_half + s,
                                                   n_s_tiles - 1)))],
            out_specs=pl.BlockSpec((1, 1, C, 1), lambda h, n, s: (h, n, 0, 0)),
            scratch_shapes=[pltpu.VMEM((C, 1), jnp.float32)],
        ),
        compiler_params=pltpu.CompilerParams(
            dimension_semantics=("parallel", "parallel", "arbitrary"),
            vmem_limit_bytes=_VMEM_LIMIT_BYTES),
    )(x_flat)

    # cSE excitation on (N, C): tiny, plain JAX (negligible vs. HBM traffic).
    mean = jnp.sum(partial_sums, axis=0)[:, :, 0] / jnp.float32(S)   # (N, C)
    z1 = jax.nn.relu(mean @ w1.astype(f32).T + b1.astype(f32))
    z2 = jax.nn.sigmoid(z1 @ w2.astype(f32).T + b2.astype(f32))      # (N, C)
    z2_col = z2.reshape(N, C, 1).astype(f32)

    out_flat = pl.pallas_call(
        _apply_kernel,
        out_shape=jax.ShapeDtypeStruct((N, C, S), orig_dtype),
        grid_spec=pltpu.PrefetchScalarGridSpec(
            num_scalar_prefetch=0,
            grid=(N, n_s_tiles),
            in_specs=[
                pl.BlockSpec((1, C, tile_s), lambda n, s: (n, 0, s)),   # x tile
                pl.BlockSpec((1, C, 1), lambda n, s: (n, 0, 0)),        # z2 gate
                pl.BlockSpec((C, 1), lambda n, s: (0, 0)),              # ws
                pl.BlockSpec(memory_space=pltpu.MemorySpace.SMEM),      # bs scalar
            ],
            out_specs=pl.BlockSpec((1, C, tile_s), lambda n, s: (n, 0, s)),
        ),
        compiler_params=pltpu.CompilerParams(
            dimension_semantics=("parallel", "parallel"),
            vmem_limit_bytes=_VMEM_LIMIT_BYTES),
    )(x_flat, z2_col, ws_col, bs_arr)

    return out_flat.reshape(N, C, D, H, W)


def _reference(x, w1, b1, w2, b2, ws, bs):
    """Pure-JAX reference mirroring the PyTorch forward."""
    # cSE
    mean = jnp.mean(x, axis=(2, 3, 4))                          # (N, C)
    z1 = jax.nn.relu(mean @ w1.T + b1)                          # (N, Cr)
    z2 = jax.nn.sigmoid(z1 @ w2.T + b2)                         # (N, C)
    cse = x * z2[:, :, None, None, None]
    # sSE
    s = jnp.einsum('ncdhw,c->ndhw', x, ws) + bs[0]              # (N, D, H, W)
    sse = x * jax.nn.sigmoid(s)[:, None]
    return cse + sse


if __name__ == "__main__":
    key = jax.random.PRNGKey(0)
    N, C = 2, 4
    reduction_ratio = 2
    Cr = C // reduction_ratio

    k = jax.random.split(key, 8)
    # Deterministic synthetic parameters (1x1x1 Conv3d kernels as dense matrices).
    w1 = 0.3 * jax.random.normal(k[1], (Cr, C), dtype=jnp.float32)   # fc1.weight
    b1 = 0.1 * jax.random.normal(k[2], (Cr,), dtype=jnp.float32)     # fc1.bias
    w2 = 0.3 * jax.random.normal(k[3], (C, Cr), dtype=jnp.float32)   # fc2.weight
    b2 = 0.1 * jax.random.normal(k[4], (C,), dtype=jnp.float32)      # fc2.bias
    ws = 0.3 * jax.random.normal(k[5], (C,), dtype=jnp.float32)      # sSE conv.weight
    bs = 0.1 * jax.random.normal(k[6], (1,), dtype=jnp.float32)      # sSE conv.bias

    # --- test 1: single-pass fused path (default dispatch for small slabs) ---
    x1 = jax.random.normal(k[0], (N, C, 8, 8, 8), dtype=jnp.float32)
    out1 = jax.block_until_ready(channel_spatial_se(x1, w1, b1, w2, b2, ws, bs))
    ref1 = _reference(x1, w1, b1, w2, b2, ws, bs)
    assert out1.shape == ref1.shape
    assert jnp.allclose(out1, ref1, atol=1e-5, rtol=1e-5), "single-pass mismatch"

    # --- test 2: force the two-pass tiled path with a non-128-aligned S -------
    x2 = jax.random.normal(k[7], (N, C, 5, 7, 9), dtype=jnp.float32)   # S = 315
    out2 = jax.block_until_ready(
        channel_spatial_se(x2, w1, b1, w2, b2, ws, bs,
                           single_pass_max_bytes=0,
                           target_block_bytes=128 * C * 4))
    ref2 = _reference(x2, w1, b1, w2, b2, ws, bs)
    assert out2.shape == ref2.shape
    assert jnp.allclose(out2, ref2, atol=1e-5, rtol=1e-5), "two-pass mismatch"

    print("KERNEL_OK")
</pallas_src>

<mosaic_0001>
module attributes {stable_mosaic.version = 11 : i64} {
  func.func @_fused_kernel(%arg0: i32, %arg1: memref<1x4x512xf32, #tpu.memory_space<vmem>>, %arg2: memref<4x2xf32, #tpu.memory_space<vmem>>, %arg3: memref<1x2xf32, #tpu.memory_space<vmem>>, %arg4: memref<4x2xf32, #tpu.memory_space<vmem>>, %arg5: memref<4x1xf32, #tpu.memory_space<vmem>>, %arg6: memref<4x1xf32, #tpu.memory_space<vmem>>, %arg7: memref<1xf32, #tpu.memory_space<smem>>, %arg8: memref<1x4x512xf32, #tpu.memory_space<vmem>>) attributes {dimension_semantics = [#tpu.dimension_semantics<parallel>], iteration_bounds = array<i64: 2>, scalar_prefetch = 0 : i64, scratch_operands = 0 : i64, tpu.core_type = #tpu.core_type<tc>, window_params = [{transform_indices = @transform_0, window_bounds = array<i64: 1, 4, 512>}, {pipeline_mode = #tpu.pipeline_mode<synchronous>, transform_indices = @transform_1, window_bounds = array<i64: 4, 2>}, {pipeline_mode = #tpu.pipeline_mode<synchronous>, transform_indices = @transform_2, window_bounds = array<i64: 1, 2>}, {pipeline_mode = #tpu.pipeline_mode<synchronous>, transform_indices = @transform_3, window_bounds = array<i64: 4, 2>}, {pipeline_mode = #tpu.pipeline_mode<synchronous>, transform_indices = @transform_4, window_bounds = array<i64: 4, 1>}, {pipeline_mode = #tpu.pipeline_mode<synchronous>, transform_indices = @transform_5, window_bounds = array<i64: 4, 1>}, {transform_indices = @transform_6, window_bounds = array<i64: 1>}, {transform_indices = @transform_7, window_bounds = array<i64: 1, 4, 512>}]} {
    %c0 = arith.constant 0 : index
    %c0_0 = arith.constant 0 : index
    %c0_1 = arith.constant 0 : index
    %0 = vector.load %arg1[%c0, %c0_0, %c0_1] : memref<1x4x512xf32, #tpu.memory_space<vmem>>, vector<1x4x512xf32>
    %1 = vector.shape_cast %0 : vector<1x4x512xf32> to vector<4x512xf32>
    %cst = arith.constant dense<0.000000e+00> : vector<4xf32>
    %2 = vector.multi_reduction <add>, %1, %cst [1] : vector<4x512xf32> to vector<4xf32>
    %3 = vector.shape_cast %2 : vector<4xf32> to vector<4x1xf32>
    %cst_2 = arith.constant 0.001953125 : f32
    %4 = vector.broadcast %cst_2 : f32 to vector<4x1xf32>
    %5 = arith.mulf %3, %4 : vector<4x1xf32>
    %c0_3 = arith.constant 0 : index
    %c0_4 = arith.constant 0 : index
    %6 = vector.load %arg2[%c0_3, %c0_4] : memref<4x2xf32, #tpu.memory_space<vmem>>, vector<4x2xf32>
    %7 = vector.broadcast %5 : vector<4x1xf32> to vector<4x2xf32>
    %8 = arith.mulf %6, %7 : vector<4x2xf32>
    %cst_5 = arith.constant dense<0.000000e+00> : vector<2xf32>
    %9 = vector.multi_reduction <add>, %8, %cst_5 [0] : vector<4x2xf32> to vector<2xf32>
    %10 = vector.shape_cast %9 : vector<2xf32> to vector<1x2xf32>
    %c0_6 = arith.constant 0 : index
    %c0_7 = arith.constant 0 : index
    %11 = vector.load %arg3[%c0_6, %c0_7] : memref<1x2xf32, #tpu.memory_space<vmem>>, vector<1x2xf32>
    %12 = arith.addf %10, %11 : vector<1x2xf32>
    %cst_8 = arith.constant 0.000000e+00 : f32
    %13 = vector.broadcast %cst_8 : f32 to vector<1x2xf32>
    %14 = arith.maximumf %12, %13 : vector<1x2xf32>
    %c0_9 = arith.constant 0 : index
    %c0_10 = arith.constant 0 : index
    %15 = vector.load %arg4[%c0_9, %c0_10] : memref<4x2xf32, #tpu.memory_space<vmem>>, vector<4x2xf32>
    %16 = vector.broadcast %14 : vector<1x2xf32> to vector<4x2xf32>
    %17 = arith.mulf %15, %16 : vector<4x2xf32>
    %cst_11 = arith.constant dense<0.000000e+00> : vector<4xf32>
    %18 = vector.multi_reduction <add>, %17, %cst_11 [1] : vector<4x2xf32> to vector<4xf32>
    %19 = vector.shape_cast %18 : vector<4xf32> to vector<4x1xf32>
    %c0_12 = arith.constant 0 : index
    %c0_13 = arith.constant 0 : index
    %20 = vector.load %arg5[%c0_12, %c0_13] : memref<4x1xf32, #tpu.memory_space<vmem>>, vector<4x1xf32>
    %21 = arith.addf %19, %20 : vector<4x1xf32>
    %22 = arith.negf %21 : vector<4x1xf32>
    %23 = math.exp %22 : vector<4x1xf32>
    %cst_14 = arith.constant 1.000000e+00 : f32
    %24 = vector.broadcast %cst_14 : f32 to vector<4x1xf32>
    %25 = arith.addf %24, %23 : vector<4x1xf32>
    %26 = arith.divf %24, %25 : vector<4x1xf32>
    %c0_15 = arith.constant 0 : index
    %c0_16 = arith.constant 0 : index
    %27 = vector.load %arg6[%c0_15, %c0_16] : memref<4x1xf32, #tpu.memory_space<vmem>>, vector<4x1xf32>
    %28 = vector.broadcast %27 : vector<4x1xf32> to vector<4x512xf32>
    %29 = arith.mulf %1, %28 : vector<4x512xf32>
    %cst_17 = arith.constant dense<0.000000e+00> : vector<512xf32>
    %30 = vector.multi_reduction <add>, %29, %cst_17 [0] : vector<4x512xf32> to vector<512xf32>
    %31 = vector.shape_cast %30 : vector<512xf32> to vector<1x512xf32>
    %c0_18 = arith.constant 0 : index
    %32 = memref.load %arg7[%c0_18] : memref<1xf32, #tpu.memory_space<smem>>
    %33 = vector.broadcast %32 : f32 to vector<1x512xf32>
    %34 = arith.addf %31, %33 : vector<1x512xf32>
    %35 = arith.negf %34 : vector<1x512xf32>
    %36 = math.exp %35 : vector<1x512xf32>
    %cst_19 = arith.constant 1.000000e+00 : f32
    %37 = vector.broadcast %cst_19 : f32 to vector<1x512xf32>
    %38 = arith.addf %37, %36 : vector<1x512xf32>
    %39 = arith.divf %37, %38 : vector<1x512xf32>
    %40 = vector.broadcast %26 : vector<4x1xf32> to vector<4x512xf32>
    %41 = vector.broadcast %39 : vector<1x512xf32> to vector<4x512xf32>
    %42 = arith.addf %40, %41 : vector<4x512xf32>
    %43 = arith.mulf %1, %42 : vector<4x512xf32>
    %c0_20 = arith.constant 0 : index
    %c0_21 = arith.constant 0 : index
    %c0_22 = arith.constant 0 : index
    %44 = vector.load %arg8[%c0_20, %c0_21, %c0_22] : memref<1x4x512xf32, #tpu.memory_space<vmem>>, vector<1x4x512xf32>
    %45 = vector.shape_cast %44 : vector<1x4x512xf32> to vector<4x512xf32>
    %46 = vector.shape_cast %43 : vector<4x512xf32> to vector<1x4x512xf32>
    tpu.vector_store %arg8[%c0_20, %c0_21, %c0_22], %46 {strides = array<i32>} : memref<1x4x512xf32, #tpu.memory_space<vmem>>, vector<1x4x512xf32>,
    return
  }
  func.func @transform_0(%arg0: i32) -> (i32, i32, i32) {
    %c0_i32 = arith.constant 0 : i32
    %c0_i32_0 = arith.constant 0 : i32
    %c0_i32_1 = arith.constant 0 : i32
    return %arg0, %c0_i32, %c0_i32_0 : i32, i32, i32
  }
  func.func @transform_1(%arg0: i32) -> (i32, i32) {
    %c0_i32 = arith.constant 0 : i32
    %c0_i32_0 = arith.constant 0 : i32
    %c0_i32_1 = arith.constant 0 : i32
    return %c0_i32, %c0_i32_0 : i32, i32
  }
  func.func @transform_2(%arg0: i32) -> (i32, i32) {
    %c0_i32 = arith.constant 0 : i32
    %c0_i32_0 = arith.constant 0 : i32
    %c0_i32_1 = arith.constant 0 : i32
    return %c0_i32, %c0_i32_0 : i32, i32
  }
  func.func @transform_3(%arg0: i32) -> (i32, i32) {
    %c0_i32 = arith.constant 0 : i32
    %c0_i32_0 = arith.constant 0 : i32
    %c0_i32_1 = arith.constant 0 : i32
    return %c0_i32, %c0_i32_0 : i32, i32
  }
  func.func @transform_4(%arg0: i32) -> (i32, i32) {
    %c0_i32 = arith.constant 0 : i32
    %c0_i32_0 = arith.constant 0 : i32
    %c0_i32_1 = arith.constant 0 : i32
    return %c0_i32, %c0_i32_0 : i32, i32
  }
  func.func @transform_5(%arg0: i32) -> (i32, i32) {
    %c0_i32 = arith.constant 0 : i32
    %c0_i32_0 = arith.constant 0 : i32
    %c0_i32_1 = arith.constant 0 : i32
    return %c0_i32, %c0_i32_0 : i32, i32
  }
  func.func @transform_6(%arg0: i32) -> i32 {
    %c0_i32 = arith.constant 0 : i32
    %c0_i32_0 = arith.constant 0 : i32
    return %c0_i32 : i32
  }
  func.func @transform_7(%arg0: i32) -> (i32, i32, i32) {
    %c0_i32 = arith.constant 0 : i32
    %c0_i32_0 = arith.constant 0 : i32
    %c0_i32_1 = arith.constant 0 : i32
    return %arg0, %c0_i32, %c0_i32_0 : i32, i32, i32
  }
}

</mosaic_0001>

<llo_original>
// kernel: tpu_custom_call.1
$region0: #{tpu_custom_call.1}
  #allocation0 [shape = 'u32[]', space=smem, size = 0x4, offset = 0x4, fixed_abs, tag = 'smem constant byte address 0x4 - core index']
  #allocation1 [shape = 'u32[144,128]{1,0:T(1,128)}', space=vmem, size = 0x12000, scoped, tag = 'internal scratch']
  #allocation2 [shape = 'f32[1]{0:T(128)S(6)}', space=smem, size = 0x200, scoped, tag = 'scoped memory for tpu_custom_call.1']
  %s0 = inlined_call_operand.hbm [shape: f32[2,4,512], index: 0, kind: input, shape index: {}]
  %s1 = inlined_call_operand.vmem [shape: f32[4,2], index: 1, kind: input, shape index: {}]
  %s2 = inlined_call_operand.vmem [shape: f32[1,2], index: 2, kind: input, shape index: {}]
  %s3 = inlined_call_operand.vmem [shape: f32[4,2], index: 3, kind: input, shape index: {}]
  %s4 = inlined_call_operand.vmem [shape: f32[4,1], index: 4, kind: input, shape index: {}]
  %s5 = inlined_call_operand.vmem [shape: f32[4,1], index: 5, kind: input, shape index: {}]
  %s6 = inlined_call_operand.<no memory space> [shape: f32[1], index: 6, kind: input, shape index: {}]
  %s7 = inlined_call_operand.hbm [shape: f32[2,4,512], index: 7, kind: output, shape index: {}]
  %s8 = sld [smem:[#allocation0]]
  $region65: #{tpu_custom_call.1} parent=0
    _
  %s10 = ssub.s32 1, %s8
  %s11 = scalar_select 0, %s10, %s8
  %12 = sst [smem:[#allocation2]] %s6
  $region1: #{tpu_custom_call.1} parent=0
    #allocation3 [shape = 'u8[16384]{0}', space=vmem, size = 0x4000, scoped, tag = 'input window, operand 0']
    #allocation4 [shape = 's32[2]{0}', space=sflag, size = 0x8, scoped, tag = 'scoped memory for tpu_custom_call.1']
    #allocation5 [shape = 's32[2]{0}', space=sflag, size = 0x8, scoped, tag = 'scoped memory for tpu_custom_call.1']
    #allocation6 [shape = 'u8[16384]{0}', space=vmem, size = 0x4000, scoped, tag = 'output window, operand 0']
    %13 = vsyncpa [#allocation4], 0
    %s14 = scalar_lea.sflag [#allocation4], 1
    %15 = vsyncpa %s14, 0
    %16 = vsyncpa [#allocation5], 0
    %s17 = scalar_lea.sflag [#allocation5], 1
    %18 = vsyncpa %s17, 0
    loop: start=0, step=1, limit=4
    $region2: #{tpu_custom_call.1} parent=1 // loop_pre_header
      _
    $region3: #{tpu_custom_call.1} parent=1 // loop_header
      %s20 = sphi 0, %s24
      %p21 = scmp.ge.s32.totalorder %s20, 4
      %s30 = sphi 0, %s32
      %s33 = sphi 0, %s30
      %s34 = sphi 0, %s33
      %s50 = sphi 0, %s34
      %s54 = sphi 0, %s54
      %s56 = sphi 0, %s54
      %s57 = sphi 0, %s56
      %s71 = sphi 0, %s57
      %s75 = sphi 0, %s75
      %s77 = sphi 0, %s75
      %s78 = sphi 0, %s77
      %s92 = sphi 0, %s78
      %s96 = sphi 0, %s96
      %s98 = sphi 0, %s96
      %s99 = sphi 0, %s98
      %s113 = sphi 0, %s99
      %s117 = sphi 0, %s117
      %s119 = sphi 0, %s117
      %s120 = sphi 0, %s119
      %s134 = sphi 0, %s120
      %s138 = sphi 0, %s138
      %s140 = sphi 0, %s138
      %s141 = sphi 0, %s140
      %s155 = sphi 0, %s141
      %s159 = sphi 0, %s159
      %s161 = sphi 0, %s159
      %s162 = sphi 0, %s161
      %s176 = sphi 0, %s162
      %s182 = sphi 0, %s184
      %s185 = sphi 0, %s182
      %s186 = sphi 0, %s185
      %s202 = sphi 0, %s186
    $region4: #{tpu_custom_call.1} parent=1 // loop_header_branch
      %23 = sbr.rel (%p21) target = $region8
    $region5: #{tpu_custom_call.1} parent=1 // loop_body
      %s25 = ssub.s32 %s20, 1
      %s26 = ssub.s32 %s20, 2
      %s27 = sadd.s32 %s20, 1
      %s28 = ssub.s32 %s20, %s27
      %p29 = scmp.eq.s32.totalorder %s28, 0
      %s31 = sadd.s32 %s30, 1
      %s32 = scalar_select %p29, %s30, %s31
      %p35 = pneg %p29
      %p36 = scmp.eq.s32.totalorder %s20, 1
      %p37 = por %p35, %p36
      %p38 = scmp.ne.s32.totalorder %s30, %s33
      %p39 = scmp.eq.s32.totalorder %s20, 0
      %p40 = por %p38, %p39
      %p41 = scmp.ne.s32.totalorder %s30, %s33
      %p42 = scmp.eq.s32.totalorder %s25, 1
      %p43 = por %p41, %p42
      %p44 = scmp.ne.s32.totalorder %s33, %s34
      %p45 = scmp.eq.s32.totalorder %s25, 0
      %p46 = por %p44, %p45
      %p47 = scmp.ne.s32.totalorder %s33, %s34
      %p48 = scmp.eq.s32.totalorder %s26, 1
      %p49 = por %p47, %p48
      %p51 = scmp.ne.s32.totalorder %s34, %s50
      %p52 = scmp.eq.s32.totalorder %s26, 0
      %p53 = por %p51, %p52
      %s55 = sadd.s32 %s54, 1
      %p58 = scmp.eq.s32.totalorder %s20, 1
      %p59 = scmp.ne.s32.totalorder %s54, %s56
      %p60 = scmp.eq.s32.totalorder %s20, 0
      %p61 = por %p59, %p60
      %p62 = scmp.ne.s32.totalorder %s54, %s56
      %p63 = scmp.eq.s32.totalorder %s25, 1
      %p64 = por %p62, %p63
      %p65 = scmp.ne.s32.totalorder %s56, %s57
      %p66 = scmp.eq.s32.totalorder %s25, 0
      %p67 = por %p65, %p66
      %p68 = scmp.ne.s32.totalorder %s56, %s57
      %p69 = scmp.eq.s32.totalorder %s26, 1
      %p70 = por %p68, %p69
      %p72 = scmp.ne.s32.totalorder %s57, %s71
      %p73 = scmp.eq.s32.totalorder %s26, 0
      %p74 = por %p72, %p73
      %s76 = sadd.s32 %s75, 1
      %p79 = scmp.eq.s32.totalorder %s20, 1
      %p80 = scmp.ne.s32.totalorder %s75, %s77
      %p81 = scmp.eq.s32.totalorder %s20, 0
      %p82 = por %p80, %p81
      %p83 = scmp.ne.s32.totalorder %s75, %s77
      %p84 = scmp.eq.s32.totalorder %s25, 1
      %p85 = por %p83, %p84
      %p86 = scmp.ne.s32.totalorder %s77, %s78
      %p87 = scmp.eq.s32.totalorder %s25, 0
      %p88 = por %p86, %p87
      %p89 = scmp.ne.s32.totalorder %s77, %s78
      %p90 = scmp.eq.s32.totalorder %s26, 1
      %p91 = por %p89, %p90
      %p93 = scmp.ne.s32.totalorder %s78, %s92
      %p94 = scmp.eq.s32.totalorder %s26, 0
      %p95 = por %p93, %p94
      %s97 = sadd.s32 %s96, 1
      %p100 = scmp.eq.s32.totalorder %s20, 1
      %p101 = scmp.ne.s32.totalorder %s96, %s98
      %p102 = scmp.eq.s32.totalorder %s20, 0
      %p103 = por %p101, %p102
      %p104 = scmp.ne.s32.totalorder %s96, %s98
      %p105 = scmp.eq.s32.totalorder %s25, 1
      %p106 = por %p104, %p105
      %p107 = scmp.ne.s32.totalorder %s98, %s99
      %p108 = scmp.eq.s32.totalorder %s25, 0
      %p109 = por %p107, %p108
      %p110 = scmp.ne.s32.totalorder %s98, %s99
      %p111 = scmp.eq.s32.totalorder %s26, 1
      %p112 = por %p110, %p111
      %p114 = scmp.ne.s32.totalorder %s99, %s113
      %p115 = scmp.eq.s32.totalorder %s26, 0
      %p116 = por %p114, %p115
      %s118 = sadd.s32 %s117, 1
      %p121 = scmp.eq.s32.totalorder %s20, 1
      %p122 = scmp.ne.s32.totalorder %s117, %s119
      %p123 = scmp.eq.s32.totalorder %s20, 0
      %p124 = por %p122, %p123
      %p125 = scmp.ne.s32.totalorder %s117, %s119
      %p126 = scmp.eq.s32.totalorder %s25, 1
      %p127 = por %p125, %p126
      %p128 = scmp.ne.s32.totalorder %s119, %s120
      %p129 = scmp.eq.s32.totalorder %s25, 0
      %p130 = por %p128, %p129
      %p131 = scmp.ne.s32.totalorder %s119, %s120
      %p132 = scmp.eq.s32.totalorder %s26, 1
      %p133 = por %p131, %p132
      %p135 = scmp.ne.s32.totalorder %s120, %s134
      %p136 = scmp.eq.s32.totalorder %s26, 0
      %p137 = por %p135, %p136
      %s139 = sadd.s32 %s138, 1
      %p142 = scmp.eq.s32.totalorder %s20, 1
      %p143 = scmp.ne.s32.totalorder %s138, %s140
      %p144 = scmp.eq.s32.totalorder %s20, 0
      %p145 = por %p143, %p144
      %p146 = scmp.ne.s32.totalorder %s138, %s140
      %p147 = scmp.eq.s32.totalorder %s25, 1
      %p148 = por %p146, %p147
      %p149 = scmp.ne.s32.totalorder %s140, %s141
      %p150 = scmp.eq.s32.totalorder %s25, 0
      %p151 = por %p149, %p150
      %p152 = scmp.ne.s32.totalorder %s140, %s141
      %p153 = scmp.eq.s32.totalorder %s26, 1
      %p154 = por %p152, %p153
      %p156 = scmp.ne.s32.totalorder %s141, %s155
      %p157 = scmp.eq.s32.totalorder %s26, 0
      %p158 = por %p156, %p157
      %s160 = sadd.s32 %s159, 1
      %p163 = scmp.eq.s32.totalorder %s20, 1
      %p164 = scmp.ne.s32.totalorder %s159, %s161
      %p165 = scmp.eq.s32.totalorder %s20, 0
      %p166 = por %p164, %p165
      %p167 = scmp.ne.s32.totalorder %s159, %s161
      %p168 = scmp.eq.s32.totalorder %s25, 1
      %p169 = por %p167, %p168
      %p170 = scmp.ne.s32.totalorder %s161, %s162
      %p171 = scmp.eq.s32.totalorder %s25, 0
      %p172 = por %p170, %p171
      %p173 = scmp.ne.s32.totalorder %s161, %s162
      %p174 = scmp.eq.s32.totalorder %s26, 1
      %p175 = por %p173, %p174
      %p177 = scmp.ne.s32.totalorder %s162, %s176
      %p178 = scmp.eq.s32.totalorder %s26, 0
      %p179 = por %p177, %p178
      %s180 = ssub.s32 %s20, %s27
      %p181 = scmp.eq.s32.totalorder %s180, 0
      %s183 = sadd.s32 %s182, 1
      %s184 = scalar_select %p181, %s182, %s183
      %p187 = pneg %p181
      %p188 = scmp.eq.s32.totalorder %s20, 1
      %p189 = por %p187, %p188
      %p190 = scmp.ne.s32.totalorder %s182, %s185
      %p191 = scmp.eq.s32.totalorder %s20, 0
      %p192 = por %p190, %p191
      %p193 = scmp.ne.s32.totalorder %s182, %s185
      %p194 = scmp.eq.s32.totalorder %s25, 1
      %p195 = por %p193, %p194
      %p196 = scmp.ne.s32.totalorder %s185, %s186
      %p197 = scmp.eq.s32.totalorder %s25, 0
      %p198 = por %p196, %p197
      %p199 = scmp.ne.s32.totalorder %s185, %s186
      %p200 = scmp.eq.s32.totalorder %s26, 1
      %p201 = por %p199, %p200
      %p203 = scmp.ne.s32.totalorder %s186, %s202
      %p204 = scmp.eq.s32.totalorder %s26, 0
      %p205 = por %p203, %p204
      %p206 = scmp.le.s32.totalorder 1, %s20
      %p207 = scmp.lt.s32.totalorder %s20, 3
      %p208 = pnand %p206, %p207
      %p209 = pneg %p208
      // Predicated region
      $region9: #{tpu_custom_call.1} parent=5 // pred_check
        _
      $region10: #{tpu_custom_call.1} parent=5 // pred_check_branch
        %211 = sbr.rel (%p208) target = $region12
      $region11: #{tpu_custom_call.1} parent=5 // pred_region
        %s212 = ssub.s32 %s20, 1
        // Predicated region
        $region13: #{tpu_custom_call.1} parent=11 // pred_check
          %p213 = pneg %p67
        $region14: #{tpu_custom_call.1} parent=11 // pred_check_branch
          %215 = sbr.rel (%p213) target = $region16
        $region15: #{tpu_custom_call.1} parent=11 // pred_region
          _
        $region16: #{tpu_custom_call.1} parent=11 // pred_fallthru
          _
        // Predicated region
        $region17: #{tpu_custom_call.1} parent=11 // pred_check
          %p216 = pneg %p88
        $region18: #{tpu_custom_call.1} parent=11 // pred_check_branch
          %218 = sbr.rel (%p216) target = $region20
        $region19: #{tpu_custom_call.1} parent=11 // pred_region
          _
        $region20: #{tpu_custom_call.1} parent=11 // pred_fallthru
          _
        // Predicated region
        $region21: #{tpu_custom_call.1} parent=11 // pred_check
          %p219 = pneg %p109
        $region22: #{tpu_custom_call.1} parent=11 // pred_check_branch
          %221 = sbr.rel (%p219) target = $region24
        $region23: #{tpu_custom_call.1} parent=11 // pred_region
          _
        $region24: #{tpu_custom_call.1} parent=11 // pred_fallthru
          _
        // Predicated region
        $region25: #{tpu_custom_call.1} parent=11 // pred_check
          %p222 = pneg %p130
        $region26: #{tpu_custom_call.1} parent=11 // pred_check_branch
          %224 = sbr.rel (%p222) target = $region28
        $region27: #{tpu_custom_call.1} parent=11 // pred_region
          _
        $region28: #{tpu_custom_call.1} parent=11 // pred_fallthru
          _
        // Predicated region
        $region29: #{tpu_custom_call.1} parent=11 // pred_check
          %p225 = pneg %p151
        $region30: #{tpu_custom_call.1} parent=11 // pred_check_branch
          %227 = sbr.rel (%p225) target = $region32
        $region31: #{tpu_custom_call.1} parent=11 // pred_region
          _
        $region32: #{tpu_custom_call.1} parent=11 // pred_fallthru
          _
        // Predicated region
        $region33: #{tpu_custom_call.1} parent=11 // pred_check
          %p228 = pneg %p172
        $region34: #{tpu_custom_call.1} parent=11 // pred_check_branch
          %230 = sbr.rel (%p228) target = $region36
        $region35: #{tpu_custom_call.1} parent=11 // pred_region
          _
        $region36: #{tpu_custom_call.1} parent=11 // pred_fallthru
          _
      $region12: #{tpu_custom_call.1} parent=5 // pred_fallthru
        _
      %p231 = scmp.lt.s32.totalorder %s20, 2
      // Predicated region
      $region37: #{tpu_custom_call.1} parent=5 // pred_check
        %p232 = pneg %p231
      $region38: #{tpu_custom_call.1} parent=5 // pred_check_branch
        %234 = sbr.rel (%p232) target = $region40
      $region39: #{tpu_custom_call.1} parent=5 // pred_region
        // Predicated region
        $region41: #{tpu_custom_call.1} parent=39 // pred_check
          %p235 = pneg %p40
        $region42: #{tpu_custom_call.1} parent=39 // pred_check_branch
          %237 = sbr.rel (%p235) target = $region44
        $region43: #{tpu_custom_call.1} parent=39 // pred_region
          %s238 = sand.u32 %s30, 1
          %s239 = scalar_lea.sflag [#allocation4], %s238
          %s240 = sand.u32 %s30, 1
          %s241 = smul.addr %s240, 16
          %s242 = scalar_lea.vmem [#allocation3], %s241
          %s244 = ssub.s32 256, 256
          %245 = vsyncadd %s239, %s244
          %s246 = smul.addr %s20, 4
          %s247 = smul.addr %s246, 64
          %s248 = scalar_lea.hbm %s0, %s247
          %s250 = sshll.u32 %s242, 4
          %s251 = int_to_ptr.vmem [resolvable:$true] %s250
          %253 = dma.hbm_to_vmem [thread:$0]  %s248, 256, %s251, %s239
        $region44: #{tpu_custom_call.1} parent=39 // pred_fallthru
          _
      $region40: #{tpu_custom_call.1} parent=5 // pred_fallthru
        _
      %p254 = scmp.le.s32.totalorder 1, %s20
      %p255 = scmp.lt.s32.totalorder %s20, 3
      %p256 = pnand %p254, %p255
      %p257 = pneg %p256
      // Predicated region
      $region45: #{tpu_custom_call.1} parent=5 // pred_check
        _
      $region46: #{tpu_custom_call.1} parent=5 // pred_check_branch
        %259 = sbr.rel (%p256) target = $region48
      $region47: #{tpu_custom_call.1} parent=5 // pred_region
        %s260 = ssub.s32 %s20, 1
        %s261 = sand.u32 %s33, 1
        %s262 = scalar_lea.sflag [#allocation4], %s261
        %s263 = sand.u32 %s33, 1
        %s264 = smul.addr %s263, 16
        %s265 = scalar_lea.vmem [#allocation3], %s264
        // Predicated region
        $region49: #{tpu_custom_call.1} parent=47 // pred_check
          %p266 = pneg %p46
        $region50: #{tpu_custom_call.1} parent=47 // pred_check_branch
          %268 = sbr.rel (%p266) target = $region52
        $region51: #{tpu_custom_call.1} parent=47 // pred_region
          %269 = dma.done %s262, 256
        $region52: #{tpu_custom_call.1} parent=47 // pred_fallthru
          _
        %s270 = sand.u32 %s33, 1
        %s271 = scalar_lea.sflag [#allocation4], %s270
        %s272 = sand.u32 %s33, 1
        %s273 = smul.addr %s272, 16
        %s274 = scalar_lea.vmem [#allocation3], %s273
        %p275 = pneg %p46
        %p276 = pneg %p43
        %p277 = pneg %p67
        %p278 = pneg %p64
        %p279 = pneg %p88
        %p280 = pneg %p85
        %p281 = pneg %p109
        %p282 = pneg %p106
        %p283 = pneg %p130
        %p284 = pneg %p127
        %p285 = pneg %p151
        %p286 = pneg %p148
        %p287 = pneg %p172
        %p288 = pneg %p169
        %p289 = pneg %p198
        %p290 = pneg %p195
        %s291 = sand.u32 %s185, 1
        %s292 = scalar_lea.sflag [#allocation5], %s291
        %s293 = sand.u32 %s185, 1
        %s294 = smul.addr %s293, 16
        %s295 = scalar_lea.vmem [#allocation6], %s294
        %v296 = vld [vmem:[%s265] sm:$0xff]
        %v297 = vld [vmem:[%s265 + $0x8] sm:$0xff]
        %v300 = vcombine.high %v296, %v296
        %v301 = vcombine.high %v297, %v297
        %vm304 = vcmask 1043456
        %v305 = vsel %vm304, %v296, 0.0
        %v306 = vsel %vm304, %v300, 0.0
        %v307 = vadd.f32 %v305, %v306
        %v308 = vsel %vm304, %v297, 0.0
        %v309 = vadd.f32 %v307, %v308
        %v310 = vsel %vm304, %v301, 0.0
        %v311 = vadd.f32 %v309, %v310
        %312 = vadd.xlane.f32.xlu0 %v311
        %v313 = vpop.xlane.xlu0 %312
        %v314 = vmul.f32 %v313, 0.001953125
        %v315 = vld [vmem:[%s1] sm:$0xf]
        %v316 = vmul.f32 %v315, %v314
        %vm317 = vcmask 11264
        %v318 = vsel %vm317, %v316, 0.0
        %v319 = vrot.slane %v318, 4
        %v320 = vadd.f32 %v318, %v319
        %v321 = vrot.slane %v320, 2
        %v322 = vadd.f32 %v320, %v321
        %v323 = vrot.slane %v322, 1
        %v324 = vadd.f32 %v322, %v323
        %v325 = vld [vmem:[%s2] sm:$0x1]
        %v326 = vadd.f32 %v324, %v325
        %v327 = vmax.f32 %v326, 0.0
        %v328 = vld [vmem:[%s3] sm:$0xf]
        %v329 = vlaneseq
        %v330 = vshrl.u32 %v329, 7
        %v331 = vsub.s32 0, %v330
        %v332 = vrot.slane %v327, %v331
        %v333 = vmul.f32 %v328, %v332
        %v334 = vsel %vm317, %v333, 0.0
        %335 = vadd.xlane.f32.xlu0 %v334
        %v336 = vpop.xlane.xlu0 %335
        %v337 = vld [vmem:[%s4] sm:$0xf]
        %v338 = vadd.f32 %v336, %v337
        %v339 = vxor.u32 %v338, 2147483648
        %v340 = vmul.f32 %v339, 1.442695
        %v341 = vpow.pop %v340
        %v342 = vadd.f32 %v341, 1.0
        %v343 = vrcp.pop %v342
        %v344 = vmul.f32 1.0, %v343
        %v345 = vld [vmem:[%s5] sm:$0xf]
        %347 = vset.pattern.permute.xlu0 0
        %348 = vperm.xlu0 %347, %v345
        %v349 = vpop.permute.xlu0 %348
        %v351 = vunpack.c.l.s4 839922192
        %v352 = vunpack.c.0.s8 %v351
        %v353 = vlaneseq
        %v354 = vshrl.u32 %v353, 7
        %v355 = vsub.s32 %v352, %v354
        %v356 = vrot.slane %v349, %v355
        %v358 = vmul.f32 %v296, %v356
        %v359 = vmul.f32 %v297, %v356
        %v362 = vcombine.high %v358, %v358
        %v363 = vcombine.high %v359, %v359
        %v366 = vsel %vm304, %v358, 0.0
        %v367 = vrot.slane %v366, 4
        %v368 = vadd.f32 %v366, %v367
        %v369 = vrot.slane %v368, 2
        %v370 = vadd.f32 %v368, %v369
        %v371 = vrot.slane %v370, 1
        %v372 = vadd.f32 %v370, %v371
        %v373 = vsel %vm304, %v362, 0.0
        %v374 = vrot.slane %v373, 4
        %v375 = vadd.f32 %v373, %v374
        %v376 = vrot.slane %v375, 2
        %v377 = vadd.f32 %v375, %v376
        %v378 = vrot.slane %v377, 1
        %v379 = vadd.f32 %v377, %v378
        %v380 = vsel %vm304, %v359, 0.0
        %v381 = vrot.slane %v380, 4
        %v382 = vadd.f32 %v380, %v381
        %v383 = vrot.slane %v382, 2
        %v384 = vadd.f32 %v382, %v383
        %v385 = vrot.slane %v384, 1
        %v386 = vadd.f32 %v384, %v385
        %v387 = vsel %vm304, %v363, 0.0
        %v388 = vrot.slane %v387, 4
        %v389 = vadd.f32 %v387, %v388
        %v390 = vrot.slane %v389, 2
        %v391 = vadd.f32 %v389, %v390
        %v392 = vrot.slane %v391, 1
        %v393 = vadd.f32 %v391, %v392
        %s394 = sld [smem:[#allocation2]]
        %v395 = vstv %s394
        %v396 = vadd.f32 %v372, %v395
        %v397 = vadd.f32 %v379, %v395
        %v398 = vadd.f32 %v386, %v395
        %v399 = vadd.f32 %v393, %v395
        %v400 = vxor.u32 %v396, 2147483648
        %v401 = vxor.u32 %v397, 2147483648
        %v402 = vxor.u32 %v398, 2147483648
        %v403 = vxor.u32 %v399, 2147483648
        %v404 = vmul.f32 %v400, 1.442695
        %v405 = vpow.pop %v404
        %v406 = vmul.f32 %v401, 1.442695
        %v407 = vpow.pop %v406
        %v408 = vmul.f32 %v402, 1.442695
        %v409 = vpow.pop %v408
        %v410 = vmul.f32 %v403, 1.442695
        %v411 = vpow.pop %v410
        %v412 = vadd.f32 %v405, 1.0
        %v413 = vadd.f32 %v407, 1.0
        %v414 = vadd.f32 %v409, 1.0
        %v415 = vadd.f32 %v411, 1.0
        %v416 = vrcp.pop %v412
        %v417 = vmul.f32 1.0, %v416
        %v418 = vrcp.pop %v413
        %v419 = vmul.f32 1.0, %v418
        %v420 = vrcp.pop %v414
        %v421 = vmul.f32 1.0, %v420
        %v422 = vrcp.pop %v415
        %v423 = vmul.f32 1.0, %v422
        %425 = vset.pattern.permute.xlu0 0
        %426 = vperm.xlu0 %425, %v344
        %v427 = vpop.permute.xlu0 %426
        %v429 = vadd.f32 %v427, %v417
        %v430 = vadd.f32 %v427, %v419
        %v431 = vadd.f32 %v427, %v421
        %v432 = vadd.f32 %v427, %v423
        %v437 = vcombine.low %v429, %v430
        %v438 = vcombine.low %v431, %v432
        %v441 = vmul.f32 %v296, %v437
        %v442 = vmul.f32 %v297, %v438
        %443 = vst [vmem:[%s295] sm:$0xff] %v441
        %444 = vst [vmem:[%s295 + $0x8] sm:$0xff] %v442
        %s445 = sand.u32 %s185, 1
        %s446 = scalar_lea.sflag [#allocation5], %s445
        %s447 = sand.u32 %s185, 1
        %s448 = smul.addr %s447, 16
        %s449 = scalar_lea.vmem [#allocation6], %s448
        // Predicated region
        $region53: #{tpu_custom_call.1} parent=47 // pred_check
          %p450 = pneg %p195
        $region54: #{tpu_custom_call.1} parent=47 // pred_check_branch
          %452 = sbr.rel (%p450) target = $region56
        $region55: #{tpu_custom_call.1} parent=47 // pred_region
          %s454 = ssub.s32 256, 256
          %455 = vsyncadd %s446, %s454
          %s456 = smul.addr %s25, 4
          %s457 = smul.addr %s456, 64
          %s458 = scalar_lea.hbm %s7, %s457
          %s460 = sshll.u32 %s449, 4
          %s461 = int_to_ptr.vmem [resolvable:$true] %s460
          %463 = dma.vmem_to_hbm [thread:$0]  %s461, 256, %s458, %s446
        $region56: #{tpu_custom_call.1} parent=47 // pred_fallthru
          _
      $region48: #{tpu_custom_call.1} parent=5 // pred_fallthru
        _
      %p464 = scmp.le.s32.totalorder 2, %s20
      // Predicated region
      $region57: #{tpu_custom_call.1} parent=5 // pred_check
        %p465 = pneg %p464
      $region58: #{tpu_custom_call.1} parent=5 // pred_check_branch
        %467 = sbr.rel (%p465) target = $region60
      $region59: #{tpu_custom_call.1} parent=5 // pred_region
        %s468 = ssub.s32 %s20, 2
        // Predicated region
        $region61: #{tpu_custom_call.1} parent=59 // pred_check
          %p469 = pneg %p201
        $region62: #{tpu_custom_call.1} parent=59 // pred_check_branch
          %471 = sbr.rel (%p469) target = $region64
        $region63: #{tpu_custom_call.1} parent=59 // pred_region
          %s472 = sand.u32 %s186, 1
          %s473 = scalar_lea.sflag [#allocation5], %s472
          %s474 = sand.u32 %s186, 1
          %s475 = smul.addr %s474, 16
          %s476 = scalar_lea.vmem [#allocation6], %s475
          %477 = dma.done %s473, 256
        $region64: #{tpu_custom_call.1} parent=59 // pred_fallthru
          _
      $region60: #{tpu_custom_call.1} parent=5 // pred_fallthru
        _
    $region6: #{tpu_custom_call.1} parent=1 // loop_footer
      %s24 = sadd.s32 1, %s20
    $region7: #{tpu_custom_call.1} parent=1 // loop_footer_branch
      %19 = sbr.rel target = $region3
    $region8: #{tpu_custom_call.1} parent=1 // loop_exit
      _
    %478 = vsyncpa [#allocation4], 1
    %s479 = scalar_lea.sflag [#allocation4], 1
    %480 = vsyncpa %s479, 1
    %481 = vsyncpa [#allocation5], 1
    %s482 = scalar_lea.sflag [#allocation5], 1
    %483 = vsyncpa %s482, 1

</llo_original>
